<compile_context>
chip_gen: v5e
topology: v5e:2x2
jax: 0.10.0
libtpu: 0.0.40
codegen_flags: <defaults>
</compile_context>

<pallas_src>
import functools

import jax
import jax.numpy as jnp
from jax.experimental import pallas as pl
from jax.experimental.pallas import tpu as pltpu

_MiB = 1024 * 1024
_MIN_BLOCK_BYTES = 1 * _MiB      # ~85% of HBM roofline measured at ~1 MiB blocks
_TARGET_BLOCK_BYTES = 2 * _MiB   # comfortably past the ~0.35 us per-step knee


# --------------------------------------------------------------------------- #
# Kernels
# --------------------------------------------------------------------------- #
def _se_fused_kernel(x_ref, w1t_ref, b1_ref, w2t_ref, b2_ref, o_ref, *,
                     inv_hw, native_gate):
    """Single-pass SE. x block: (Bblk, HW, C), channels lane-major."""
    # Squeeze: f32-accumulated sum over the spatial (sublane) axis straight
    # from the ref -- no whole-block f32 copy kept live across the matmuls.
    pooled = jnp.sum(x_ref[...], axis=1, dtype=jnp.float32) * inv_hw       # (Bblk, C)

    # Excitation: one batched matmul pair per grid step (noise vs. HBM traffic).
    pooled = pooled.astype(w1t_ref.dtype)
    h = jnp.dot(pooled, w1t_ref[...], preferred_element_type=jnp.float32)
    h = jnp.maximum(h + b1_ref[...], 0.0).astype(w2t_ref.dtype)            # (Bblk, Cmid)
    s = jnp.dot(h, w2t_ref[...], preferred_element_type=jnp.float32) + b2_ref[...]
    s = jax.nn.sigmoid(s)                                                  # (Bblk, C)

    # Scale: re-read x from VMEM, broadcast the per-channel gate along the
    # spatial (sublane) axis, lane-dense store.
    if native_gate:
        o_ref[...] = x_ref[...] * s.astype(o_ref.dtype)[:, None, :]
    else:  # v5e with sub-f32 input: keep the elementwise chain in f32
        o_ref[...] = (x_ref[...].astype(jnp.float32) * s[:, None, :]).astype(o_ref.dtype)


def _se_pool_gate_kernel(x_ref, w1t_ref, b1_ref, w2t_ref, b2_ref, s_ref, acc_ref, *,
                         inv_hw, hw_total, hw_tile, need_mask):
    """Two-phase fallback, pass 1: pool HW tiles into scratch, emit the gate."""
    h_idx = pl.program_id(1)

    @pl.when(h_idx == 0)
    def _():
        acc_ref[...] = jnp.zeros_like(acc_ref)

    x = x_ref[...]                                              # (1, hw_tile, C)
    if need_mask:
        row = jax.lax.broadcasted_iota(jnp.int32, (1, hw_tile, 1), 1)
        x = jnp.where(h_idx * hw_tile + row < hw_total, x, jnp.zeros([], x.dtype))
    acc_ref[...] += jnp.sum(x, axis=1, dtype=jnp.float32)       # (1, C)

    @pl.when(h_idx == pl.num_programs(1) - 1)
    def _():
        pooled = (acc_ref[...] * inv_hw).astype(w1t_ref.dtype)  # (1, C)
        h = jnp.dot(pooled, w1t_ref[...], preferred_element_type=jnp.float32)
        h = jnp.maximum(h + b1_ref[...], 0.0).astype(w2t_ref.dtype)
        s = jnp.dot(h, w2t_ref[...], preferred_element_type=jnp.float32) + b2_ref[...]
        s_ref[...] = jax.nn.sigmoid(s)[:, None, :].astype(s_ref.dtype)   # (1, 1, C)


def _se_scale_kernel(s_ref, x_ref, o_ref, *, native_gate):
    """Two-phase fallback, pass 2: apply the per-channel gate to an HW tile."""
    if native_gate:
        o_ref[...] = x_ref[...] * s_ref[...].astype(o_ref.dtype)
    else:
        o_ref[...] = (x_ref[...].astype(jnp.float32) *
                      s_ref[...].astype(jnp.float32)).astype(o_ref.dtype)


# --------------------------------------------------------------------------- #
# Wrapper helpers
# --------------------------------------------------------------------------- #
def _tpu_generation_info():
    """Return (vmem_capacity_bytes, tensorcores_per_chip, vpu_supports_bf16)."""
    kind = ""
    try:
        kind = jax.devices()[0].device_kind.lower()
    except Exception:
        pass
    is_v7 = ("v7" in kind) or ("7x" in kind)
    if is_v7:
        vmem_cap = 64 * _MiB
    elif ("v2" in kind) or ("v3" in kind):
        vmem_cap = 16 * _MiB
    else:
        vmem_cap = 128 * _MiB
    try:
        vmem_cap = int(pltpu.get_tpu_info().vmem_capacity_bytes)
    except Exception:
        pass
    if is_v7:  # per-TensorCore VMEM on v7x is 64 MiB even if the query is per-chip
        vmem_cap = min(vmem_cap, 64 * _MiB)
    num_cores = 2 if is_v7 else 1
    bf16_vpu = not any(v in kind for v in ("v2", "v3", "v4", "v5"))
    return vmem_cap, num_cores, bf16_vpu


def _pick_batch_block(batch, per_elem_bytes, max_block_bytes, num_cores):
    """Batch elements per grid block for the fused (full-HW) path.

    Size-first: each block should carry ~_TARGET_BLOCK_BYTES of x (amortizes
    the per-step overhead), capped by the VMEM budget.  Only afterwards is the
    step count nudged up for pipelining / TensorCore sharding, and never by
    shrinking a block below the ~1 MiB roofline knee.
    """
    cdiv = lambda a, b: -(-a // b)
    max_bblk = max(1, min(batch, max_block_bytes // per_elem_bytes))
    bblk = min(max_bblk, max(1, _TARGET_BLOCK_BYTES // per_elem_bytes))
    min_bblk = max(1, min(bblk, cdiv(_MIN_BLOCK_BYTES, per_elem_bytes)))
    want_steps = 2 * max(1, num_cores)          # pipeline depth per TensorCore
    while bblk > min_bblk and cdiv(batch, bblk) < want_steps:
        bblk -= 1
    if num_cores > 1:                           # avoid odd step counts on v7x
        steps = cdiv(batch, bblk)
        if steps > 1 and steps % num_cores:
            for cand in range(bblk - 1, min_bblk - 1, -1):
                if cdiv(batch, cand) % num_cores == 0:
                    bblk = cand
                    break
    return bblk


# --------------------------------------------------------------------------- #
# Public entry points
# --------------------------------------------------------------------------- #
def se_module_pallas_nhwc(x_bhwc, w1, b1, w2, b2, *, max_block_bytes=None):
    """SE forward on channels-last x: (B, HW, C).
    w1: (Cmid, C), b1: (Cmid,), w2: (C, Cmid), b2: (C,)  (1x1 conv weights)."""
    B, HW, C = x_bhwc.shape
    Cmid = w1.shape[0]
    dtype = x_bhwc.dtype
    itemsize = jnp.dtype(dtype).itemsize

    vmem_cap, num_cores, bf16_vpu = _tpu_generation_info()

    is_bf16 = jnp.dtype(dtype) == jnp.dtype(jnp.bfloat16)
    native_gate = (not is_bf16) or bf16_vpu        # bf16 VPU gate on v6e/v7x only
    param_dtype = jnp.bfloat16 if is_bf16 else jnp.float32

    # Pre-transposed weights so the kernel does (Bblk, C) @ (C, Cmid) directly.
    w1t = jnp.asarray(w1).astype(param_dtype).T                    # (C, Cmid)
    w2t = jnp.asarray(w2).astype(param_dtype).T                    # (Cmid, C)
    b1_row = jnp.asarray(b1, jnp.float32).reshape(1, Cmid)
    b2_row = jnp.asarray(b2, jnp.float32).reshape(1, C)
    weight_bytes = int((w1t.size + w2t.size) * jnp.dtype(param_dtype).itemsize
                       + (Cmid + C) * 4)

    # Generation-aware VMEM budgeting (double-buffered in+out blocks + weights).
    if vmem_cap >= 128 * _MiB:                   # v5e / v6e class
        vmem_limit = min(96 * _MiB, vmem_cap - 16 * _MiB)
        working_budget = 80 * _MiB
    elif vmem_cap >= 64 * _MiB:                  # v7x class
        vmem_limit = min(48 * _MiB, vmem_cap - 8 * _MiB)
        working_budget = 40 * _MiB
    else:                                        # older / unknown small-VMEM
        vmem_limit = max(8 * _MiB, vmem_cap - 4 * _MiB)
        working_budget = max(4 * _MiB, vmem_cap - 8 * _MiB)
    budget = max(256 * 1024, (working_budget - weight_bytes) // 4)
    if max_block_bytes is not None:              # test / tuning override
        budget = min(budget, int(max_block_bytes))

    per_elem_bytes = HW * C * itemsize
    out_shape = jax.ShapeDtypeStruct((B, HW, C), dtype)

    if per_elem_bytes <= budget:
        # ---------------- Fused single-pass path ---------------- #
        bblk = _pick_batch_block(B, per_elem_bytes, budget, num_cores)
        grid = (pl.cdiv(B, bblk),)
        kernel = functools.partial(_se_fused_kernel, inv_hw=float(1.0 / HW),
                                   native_gate=native_gate)
        cost = pl.CostEstimate(
            flops=int(2 * B * HW * C + 4 * B * C * Cmid),
            transcendentals=int(B * C),
            bytes_accessed=int(2 * B * HW * C * itemsize + weight_bytes),
        )
        return pl.pallas_call(
            kernel,
            out_shape=out_shape,
            grid_spec=pltpu.PrefetchScalarGridSpec(
                num_scalar_prefetch=0,
                grid=grid,
                in_specs=[
                    pl.BlockSpec((bblk, HW, C), lambda i: (i, 0, 0)),
                    pl.BlockSpec((C, Cmid), lambda i: (0, 0)),
                    pl.BlockSpec((1, Cmid), lambda i: (0, 0)),
                    pl.BlockSpec((Cmid, C), lambda i: (0, 0)),
                    pl.BlockSpec((1, C), lambda i: (0, 0)),
                ],
                out_specs=pl.BlockSpec((bblk, HW, C), lambda i: (i, 0, 0)),
            ),
            compiler_params=pltpu.CompilerParams(
                dimension_semantics=("parallel",),
                vmem_limit_bytes=int(vmem_limit),
            ),
            cost_estimate=cost,
        )(x_bhwc, w1t, b1_row, w2t, b2_row)

    # ---------------- Two-phase fallback (large (HW, C) slab) ---------------- #
    # Pass 1 pools HW tiles into a persistent scratch and emits the gate;
    # pass 2 re-streams x tile-by-tile and applies the gate.  x is read twice
    # (3x HBM traffic instead of 2x) but every block stays inside VMEM.
    hw_tile = (budget // (C * itemsize)) // 8 * 8
    hw_tile = int(min(max(8, hw_tile), HW))
    hw_steps = pl.cdiv(HW, hw_tile)
    need_mask = (HW % hw_tile) != 0
    gate_dtype = dtype if native_gate else jnp.float32

    pool_kernel = functools.partial(
        _se_pool_gate_kernel, inv_hw=float(1.0 / HW), hw_total=HW,
        hw_tile=hw_tile, need_mask=need_mask)
    s_all = pl.pallas_call(
        pool_kernel,
        out_shape=jax.ShapeDtypeStruct((B, 1, C), gate_dtype),
        grid_spec=pltpu.PrefetchScalarGridSpec(
            num_scalar_prefetch=0,
            grid=(B, hw_steps),
            in_specs=[
                pl.BlockSpec((1, hw_tile, C), lambda b, h: (b, h, 0)),
                pl.BlockSpec((C, Cmid), lambda b, h: (0, 0)),
                pl.BlockSpec((1, Cmid), lambda b, h: (0, 0)),
                pl.BlockSpec((Cmid, C), lambda b, h: (0, 0)),
                pl.BlockSpec((1, C), lambda b, h: (0, 0)),
            ],
            out_specs=pl.BlockSpec((1, 1, C), lambda b, h: (b, 0, 0)),
            scratch_shapes=[pltpu.VMEM((1, C), jnp.float32)],
        ),
        compiler_params=pltpu.CompilerParams(
            dimension_semantics=("parallel", "arbitrary"),
            vmem_limit_bytes=int(vmem_limit),
        ),
        cost_estimate=pl.CostEstimate(
            flops=int(2 * B * HW * C + 4 * B * C * Cmid),
            transcendentals=int(B * C),
            bytes_accessed=int(B * HW * C * itemsize + weight_bytes),
        ),
    )(x_bhwc, w1t, b1_row, w2t, b2_row)

    scale_kernel = functools.partial(_se_scale_kernel, native_gate=native_gate)
    return pl.pallas_call(
        scale_kernel,
        out_shape=out_shape,
        grid_spec=pltpu.PrefetchScalarGridSpec(
            num_scalar_prefetch=0,
            grid=(B, hw_steps),
            in_specs=[
                pl.BlockSpec((1, 1, C), lambda b, h: (b, 0, 0)),
                pl.BlockSpec((1, hw_tile, C), lambda b, h: (b, h, 0)),
            ],
            out_specs=pl.BlockSpec((1, hw_tile, C), lambda b, h: (b, h, 0)),
        ),
        compiler_params=pltpu.CompilerParams(
            dimension_semantics=("parallel", "parallel"),
            vmem_limit_bytes=int(vmem_limit),
        ),
        cost_estimate=pl.CostEstimate(
            flops=int(B * HW * C),
            transcendentals=0,
            bytes_accessed=int(2 * B * HW * C * itemsize + B * C * 4),
        ),
    )(s_all, x_bhwc)


def se_module_pallas(x_nchw, w1, b1, w2, b2, *, max_block_bytes=None):
    """NCHW interface matching the PyTorch module."""
    # TODO(synk): the NCHW<->NHWC transposes below are full HBM read+write
    # passes done by XLA outside the kernel (~3x the kernel's own traffic for a
    # purely bandwidth-bound op).  In a real network keep activations
    # channels-last and call se_module_pallas_nhwc directly so they vanish.
    B, C, H, W = x_nchw.shape
    x_bhwc = x_nchw.reshape(B, C, H * W).transpose(0, 2, 1)
    out = se_module_pallas_nhwc(x_bhwc, w1, b1, w2, b2,
                                max_block_bytes=max_block_bytes)
    return out.transpose(0, 2, 1).reshape(B, C, H, W)


def se_module_ref(x, w1, b1, w2, b2):
    """Pure-JAX reference mirroring the PyTorch forward."""
    pooled = jnp.mean(x, axis=(2, 3))                      # (B, C)
    h = jnp.maximum(pooled @ w1.T + b1, 0.0)               # (B, Cmid)
    s = jax.nn.sigmoid(h @ w2.T + b2)                      # (B, C)
    return x * s[:, :, None, None]


if __name__ == "__main__":
    B, C, reduction = 2, 32, 8
    Cmid = C // reduction

    key = jax.random.PRNGKey(0)
    kx, k1, k2, k3, k4, kx2, kx3 = jax.random.split(key, 7)

    w1 = jax.random.normal(k1, (Cmid, C), dtype=jnp.float32) * 0.1
    b1 = jax.random.normal(k2, (Cmid,), dtype=jnp.float32) * 0.1
    w2 = jax.random.normal(k3, (C, Cmid), dtype=jnp.float32) * 0.1
    b2 = jax.random.normal(k4, (C,), dtype=jnp.float32) * 0.1

    # 1) Fused path, 16x16 spatial.
    x = jax.random.normal(kx, (B, C, 16, 16), dtype=jnp.float32)
    out = jax.block_until_ready(se_module_pallas(x, w1, b1, w2, b2))
    ref = se_module_ref(x, w1, b1, w2, b2)
    assert out.shape == x.shape
    assert jnp.allclose(out, ref, atol=1e-5, rtol=1e-5), "mismatch (fused 16x16)"

    # 2) Fused path, non-tile-aligned spatial extent (7x7 -> HW=49).
    x2 = jax.random.normal(kx2, (B, C, 7, 7), dtype=jnp.float32)
    out2 = jax.block_until_ready(se_module_pallas(x2, w1, b1, w2, b2))
    ref2 = se_module_ref(x2, w1, b1, w2, b2)
    assert jnp.allclose(out2, ref2, atol=1e-5, rtol=1e-5), "mismatch (fused 7x7)"

    # 3) Fused path with a partial (cdiv) batch block: B=3 with a budget that
    #    forces bblk=2 -> grid of 2 with a masked final block.
    x3 = jax.random.normal(kx3, (3, C, 16, 16), dtype=jnp.float32)
    out3 = jax.block_until_ready(
        se_module_pallas(x3, w1, b1, w2, b2, max_block_bytes=64 * 1024))
    ref3 = se_module_ref(x3, w1, b1, w2, b2)
    assert jnp.allclose(out3, ref3, atol=1e-5, rtol=1e-5), "mismatch (partial batch block)"

    # 4) Two-phase fallback (budget < one (HW, C) slab) with a non-multiple-of-8
    #    HW tail (13x13 -> HW=169) to exercise the masked pooling reduce.
    x4 = jax.random.normal(kx, (B, C, 13, 13), dtype=jnp.float32)
    out4 = jax.block_until_ready(
        se_module_pallas(x4, w1, b1, w2, b2, max_block_bytes=16 * 1024))
    ref4 = se_module_ref(x4, w1, b1, w2, b2)
    assert jnp.allclose(out4, ref4, atol=1e-5, rtol=1e-5), "mismatch (two-phase fallback)"

    print("KERNEL_OK")
</pallas_src>

<mosaic_0001>
module attributes {stable_mosaic.version = 11 : i64} {
  func.func @_se_fused_kernel(%arg0: i32, %arg1: memref<2x256x32xf32, #tpu.memory_space<vmem>>, %arg2: memref<32x4xf32, #tpu.memory_space<vmem>>, %arg3: memref<1x4xf32, #tpu.memory_space<vmem>>, %arg4: memref<4x32xf32, #tpu.memory_space<vmem>>, %arg5: memref<1x32xf32, #tpu.memory_space<vmem>>, %arg6: memref<2x256x32xf32, #tpu.memory_space<vmem>>) attributes {dimension_semantics = [#tpu.dimension_semantics<parallel>], iteration_bounds = array<i64: 1>, scalar_prefetch = 0 : i64, scratch_operands = 0 : i64, tpu.core_type = #tpu.core_type<tc>, window_params = [{transform_indices = @transform_0, window_bounds = array<i64: 2, 256, 32>}, {pipeline_mode = #tpu.pipeline_mode<synchronous>, transform_indices = @transform_1, window_bounds = array<i64: 32, 4>}, {pipeline_mode = #tpu.pipeline_mode<synchronous>, transform_indices = @transform_2, window_bounds = array<i64: 1, 4>}, {pipeline_mode = #tpu.pipeline_mode<synchronous>, transform_indices = @transform_3, window_bounds = array<i64: 4, 32>}, {pipeline_mode = #tpu.pipeline_mode<synchronous>, transform_indices = @transform_4, window_bounds = array<i64: 1, 32>}, {transform_indices = @transform_5, window_bounds = array<i64: 2, 256, 32>}]} {
    %c0 = arith.constant 0 : index
    %c0_0 = arith.constant 0 : index
    %c0_1 = arith.constant 0 : index
    %0 = vector.load %arg1[%c0, %c0_0, %c0_1] : memref<2x256x32xf32, #tpu.memory_space<vmem>>, vector<2x256x32xf32>
    %cst = arith.constant dense<0.000000e+00> : vector<2x32xf32>
    %1 = vector.multi_reduction <add>, %0, %cst [1] : vector<2x256x32xf32> to vector<2x32xf32>
    %cst_2 = arith.constant 3.906250e-03 : f32
    %2 = vector.broadcast %cst_2 : f32 to vector<2x32xf32>
    %3 = arith.mulf %1, %2 : vector<2x32xf32>
    %c0_3 = arith.constant 0 : index
    %c0_4 = arith.constant 0 : index
    %4 = vector.load %arg2[%c0_3, %c0_4] : memref<32x4xf32, #tpu.memory_space<vmem>>, vector<32x4xf32>
    %cst_5 = arith.constant dense<0.000000e+00> : vector<2x4xf32>
    %5 = tpu.matmul %3, %4, %cst_5 {dimension_numbers = #tpu.dot_dimension_numbers<[1], [0], [0], [1], [0, 0, 1, 1], [], []>} : vector<2x32xf32>, vector<32x4xf32>, vector<2x4xf32> -> vector<2x4xf32>
    %c0_6 = arith.constant 0 : index
    %c0_7 = arith.constant 0 : index
    %6 = vector.load %arg3[%c0_6, %c0_7] : memref<1x4xf32, #tpu.memory_space<vmem>>, vector<1x4xf32>
    %7 = vector.broadcast %6 : vector<1x4xf32> to vector<2x4xf32>
    %8 = arith.addf %5, %7 : vector<2x4xf32>
    %cst_8 = arith.constant 0.000000e+00 : f32
    %9 = vector.broadcast %cst_8 : f32 to vector<2x4xf32>
    %10 = arith.maximumf %8, %9 : vector<2x4xf32>
    %c0_9 = arith.constant 0 : index
    %c0_10 = arith.constant 0 : index
    %11 = vector.load %arg4[%c0_9, %c0_10] : memref<4x32xf32, #tpu.memory_space<vmem>>, vector<4x32xf32>
    %cst_11 = arith.constant dense<0.000000e+00> : vector<2x32xf32>
    %12 = tpu.matmul %10, %11, %cst_11 {dimension_numbers = #tpu.dot_dimension_numbers<[1], [0], [0], [1], [0, 0, 1, 1], [], []>} : vector<2x4xf32>, vector<4x32xf32>, vector<2x32xf32> -> vector<2x32xf32>
    %c0_12 = arith.constant 0 : index
    %c0_13 = arith.constant 0 : index
    %13 = vector.load %arg5[%c0_12, %c0_13] : memref<1x32xf32, #tpu.memory_space<vmem>>, vector<1x32xf32>
    %14 = vector.broadcast %13 : vector<1x32xf32> to vector<2x32xf32>
    %15 = arith.addf %12, %14 : vector<2x32xf32>
    %16 = arith.negf %15 : vector<2x32xf32>
    %17 = math.exp %16 : vector<2x32xf32>
    %cst_14 = arith.constant 1.000000e+00 : f32
    %18 = vector.broadcast %cst_14 : f32 to vector<2x32xf32>
    %19 = arith.addf %18, %17 : vector<2x32xf32>
    %20 = arith.divf %18, %19 : vector<2x32xf32>
    %c0_15 = arith.constant 0 : index
    %c0_16 = arith.constant 0 : index
    %c0_17 = arith.constant 0 : index
    %21 = vector.load %arg1[%c0_15, %c0_16, %c0_17] : memref<2x256x32xf32, #tpu.memory_space<vmem>>, vector<2x256x32xf32>
    %22 = vector.shape_cast %20 : vector<2x32xf32> to vector<2x1x32xf32>
    %23 = vector.broadcast %22 : vector<2x1x32xf32> to vector<2x256x32xf32>
    %24 = arith.mulf %21, %23 : vector<2x256x32xf32>
    %c0_18 = arith.constant 0 : index
    %c0_19 = arith.constant 0 : index
    %c0_20 = arith.constant 0 : index
    %25 = vector.load %arg6[%c0_18, %c0_19, %c0_20] : memref<2x256x32xf32, #tpu.memory_space<vmem>>, vector<2x256x32xf32>
    tpu.vector_store %arg6[%c0_18, %c0_19, %c0_20], %24 {strides = array<i32>} : memref<2x256x32xf32, #tpu.memory_space<vmem>>, vector<2x256x32xf32>,
    return
  }
  func.func @transform_0(%arg0: i32) -> (i32, i32, i32) {
    %c0_i32 = arith.constant 0 : i32
    %c0_i32_0 = arith.constant 0 : i32
    %c0_i32_1 = arith.constant 0 : i32
    return %arg0, %c0_i32, %c0_i32_0 : i32, i32, i32
  }
  func.func @transform_1(%arg0: i32) -> (i32, i32) {
    %c0_i32 = arith.constant 0 : i32
    %c0_i32_0 = arith.constant 0 : i32
    %c0_i32_1 = arith.constant 0 : i32
    return %c0_i32, %c0_i32_0 : i32, i32
  }
  func.func @transform_2(%arg0: i32) -> (i32, i32) {
    %c0_i32 = arith.constant 0 : i32
    %c0_i32_0 = arith.constant 0 : i32
    %c0_i32_1 = arith.constant 0 : i32
    return %c0_i32, %c0_i32_0 : i32, i32
  }
  func.func @transform_3(%arg0: i32) -> (i32, i32) {
    %c0_i32 = arith.constant 0 : i32
    %c0_i32_0 = arith.constant 0 : i32
    %c0_i32_1 = arith.constant 0 : i32
    return %c0_i32, %c0_i32_0 : i32, i32
  }
  func.func @transform_4(%arg0: i32) -> (i32, i32) {
    %c0_i32 = arith.constant 0 : i32
    %c0_i32_0 = arith.constant 0 : i32
    %c0_i32_1 = arith.constant 0 : i32
    return %c0_i32, %c0_i32_0 : i32, i32
  }
  func.func @transform_5(%arg0: i32) -> (i32, i32, i32) {
    %c0_i32 = arith.constant 0 : i32
    %c0_i32_0 = arith.constant 0 : i32
    %c0_i32_1 = arith.constant 0 : i32
    return %arg0, %c0_i32, %c0_i32_0 : i32, i32, i32
  }
}

</mosaic_0001>

<llo_original>
// kernel: tpu_custom_call.1
$region0: #{tpu_custom_call.1}
  #allocation0 [shape = 'u32[]', space=smem, size = 0x4, offset = 0x4, fixed_abs, tag = 'smem constant byte address 0x4 - core index']
  #allocation1 [shape = 'u32[72,128]{1,0:T(1,128)}', space=vmem, size = 0x9000, scoped, tag = 'internal scratch']
  %s0 = inlined_call_operand.vmem [shape: f32[2,256,32], index: 0, kind: input, shape index: {}]
  %s1 = inlined_call_operand.vmem [shape: f32[32,4], index: 1, kind: input, shape index: {}]
  %s2 = inlined_call_operand.vmem [shape: f32[1,4], index: 2, kind: input, shape index: {}]
  %s3 = inlined_call_operand.vmem [shape: f32[4,32], index: 3, kind: input, shape index: {}]
  %s4 = inlined_call_operand.vmem [shape: f32[1,32], index: 4, kind: input, shape index: {}]
  %s5 = inlined_call_operand.vmem [shape: f32[2,256,32], index: 5, kind: output, shape index: {}]
  %s6 = sld [smem:[#allocation0]]
  $region30: #{tpu_custom_call.1} parent=0
    _
  %s8 = ssub.s32 1, %s6
  %s9 = scalar_select 0, %s8, %s6
  // Predicated region
  $region2: #{tpu_custom_call.1} parent=0 // pred_check
    _
  $region3: #{tpu_custom_call.1} parent=0 // pred_check_branch
    %11 = sbr.rel (0) target = $region5
  $region4: #{tpu_custom_call.1} parent=0 // pred_region
    _
  $region5: #{tpu_custom_call.1} parent=0 // pred_fallthru
    _
  // Predicated region
  $region6: #{tpu_custom_call.1} parent=0 // pred_check
    _
  $region7: #{tpu_custom_call.1} parent=0 // pred_check_branch
    %13 = sbr.rel (0) target = $region9
  $region8: #{tpu_custom_call.1} parent=0 // pred_region
    _
  $region9: #{tpu_custom_call.1} parent=0 // pred_fallthru
    _
  // Predicated region
  $region10: #{tpu_custom_call.1} parent=0 // pred_check
    _
  $region11: #{tpu_custom_call.1} parent=0 // pred_check_branch
    %15 = sbr.rel (0) target = $region13
  $region12: #{tpu_custom_call.1} parent=0 // pred_region
    _
  $region13: #{tpu_custom_call.1} parent=0 // pred_fallthru
    _
  // Predicated region
  $region14: #{tpu_custom_call.1} parent=0 // pred_check
    _
  $region15: #{tpu_custom_call.1} parent=0 // pred_check_branch
    %17 = sbr.rel (0) target = $region17
  $region16: #{tpu_custom_call.1} parent=0 // pred_region
    _
  $region17: #{tpu_custom_call.1} parent=0 // pred_fallthru
    _
  // Predicated region
  $region18: #{tpu_custom_call.1} parent=0 // pred_check
    _
  $region19: #{tpu_custom_call.1} parent=0 // pred_check_branch
    %19 = sbr.rel (0) target = $region21
  $region20: #{tpu_custom_call.1} parent=0 // pred_region
    _
  $region21: #{tpu_custom_call.1} parent=0 // pred_fallthru
    _
  %v20 = vld [vmem:[%s0] sm:$0xff]
  %v21 = vld [vmem:[%s0 + $0x8] sm:$0xff]
  %v22 = vld [vmem:[%s0 + $0x10] sm:$0xff]
  %v23 = vld [vmem:[%s0 + $0x18] sm:$0xff]
  %v24 = vld [vmem:[%s0 + $0x20] sm:$0xff]
  %v25 = vld [vmem:[%s0 + $0x28] sm:$0xff]
  %v26 = vld [vmem:[%s0 + $0x30] sm:$0xff]
  %v27 = vld [vmem:[%s0 + $0x38] sm:$0xff]
  %v28 = vld [vmem:[%s0 + $0x40] sm:$0xff]
  %v29 = vld [vmem:[%s0 + $0x48] sm:$0xff]
  %v30 = vld [vmem:[%s0 + $0x50] sm:$0xff]
  %v31 = vld [vmem:[%s0 + $0x58] sm:$0xff]
  %v32 = vld [vmem:[%s0 + $0x60] sm:$0xff]
  %v33 = vld [vmem:[%s0 + $0x68] sm:$0xff]
  %v34 = vld [vmem:[%s0 + $0x70] sm:$0xff]
  %v35 = vld [vmem:[%s0 + $0x78] sm:$0xff]
  %v36 = vld [vmem:[%s0 + $0x80] sm:$0xff]
  %v37 = vld [vmem:[%s0 + $0x88] sm:$0xff]
  %v38 = vld [vmem:[%s0 + $0x90] sm:$0xff]
  %v39 = vld [vmem:[%s0 + $0x98] sm:$0xff]
  %v40 = vld [vmem:[%s0 + $0xa0] sm:$0xff]
  %v41 = vld [vmem:[%s0 + $0xa8] sm:$0xff]
  %v42 = vld [vmem:[%s0 + $0xb0] sm:$0xff]
  %v43 = vld [vmem:[%s0 + $0xb8] sm:$0xff]
  %v44 = vld [vmem:[%s0 + $0xc0] sm:$0xff]
  %v45 = vld [vmem:[%s0 + $0xc8] sm:$0xff]
  %v46 = vld [vmem:[%s0 + $0xd0] sm:$0xff]
  %v47 = vld [vmem:[%s0 + $0xd8] sm:$0xff]
  %v48 = vld [vmem:[%s0 + $0xe0] sm:$0xff]
  %v49 = vld [vmem:[%s0 + $0xe8] sm:$0xff]
  %v50 = vld [vmem:[%s0 + $0xf0] sm:$0xff]
  %v51 = vld [vmem:[%s0 + $0xf8] sm:$0xff]
  %v52 = vld [vmem:[%s0 + $0x100] sm:$0xff]
  %v53 = vld [vmem:[%s0 + $0x108] sm:$0xff]
  %v54 = vld [vmem:[%s0 + $0x110] sm:$0xff]
  %v55 = vld [vmem:[%s0 + $0x118] sm:$0xff]
  %v56 = vld [vmem:[%s0 + $0x120] sm:$0xff]
  %v57 = vld [vmem:[%s0 + $0x128] sm:$0xff]
  %v58 = vld [vmem:[%s0 + $0x130] sm:$0xff]
  %v59 = vld [vmem:[%s0 + $0x138] sm:$0xff]
  %v60 = vld [vmem:[%s0 + $0x140] sm:$0xff]
  %v61 = vld [vmem:[%s0 + $0x148] sm:$0xff]
  %v62 = vld [vmem:[%s0 + $0x150] sm:$0xff]
  %v63 = vld [vmem:[%s0 + $0x158] sm:$0xff]
  %v64 = vld [vmem:[%s0 + $0x160] sm:$0xff]
  %v65 = vld [vmem:[%s0 + $0x168] sm:$0xff]
  %v66 = vld [vmem:[%s0 + $0x170] sm:$0xff]
  %v67 = vld [vmem:[%s0 + $0x178] sm:$0xff]
  %v68 = vld [vmem:[%s0 + $0x180] sm:$0xff]
  %v69 = vld [vmem:[%s0 + $0x188] sm:$0xff]
  %v70 = vld [vmem:[%s0 + $0x190] sm:$0xff]
  %v71 = vld [vmem:[%s0 + $0x198] sm:$0xff]
  %v72 = vld [vmem:[%s0 + $0x1a0] sm:$0xff]
  %v73 = vld [vmem:[%s0 + $0x1a8] sm:$0xff]
  %v74 = vld [vmem:[%s0 + $0x1b0] sm:$0xff]
  %v75 = vld [vmem:[%s0 + $0x1b8] sm:$0xff]
  %v76 = vld [vmem:[%s0 + $0x1c0] sm:$0xff]
  %v77 = vld [vmem:[%s0 + $0x1c8] sm:$0xff]
  %v78 = vld [vmem:[%s0 + $0x1d0] sm:$0xff]
  %v79 = vld [vmem:[%s0 + $0x1d8] sm:$0xff]
  %v80 = vld [vmem:[%s0 + $0x1e0] sm:$0xff]
  %v81 = vld [vmem:[%s0 + $0x1e8] sm:$0xff]
  %v82 = vld [vmem:[%s0 + $0x1f0] sm:$0xff]
  %v83 = vld [vmem:[%s0 + $0x1f8] sm:$0xff]
  %vm84 = vcmask 261120
  %v85 = vsel %vm84, %v20, 0.0
  %v86 = vsel %vm84, %v21, 0.0
  %v87 = vadd.f32 %v85, %v86
  %v88 = vsel %vm84, %v22, 0.0
  %v89 = vadd.f32 %v87, %v88
  %v90 = vsel %vm84, %v23, 0.0
  %v91 = vadd.f32 %v89, %v90
  %v92 = vsel %vm84, %v24, 0.0
  %v93 = vadd.f32 %v91, %v92
  %v94 = vsel %vm84, %v25, 0.0
  %v95 = vadd.f32 %v93, %v94
  %v96 = vsel %vm84, %v26, 0.0
  %v97 = vadd.f32 %v95, %v96
  %v98 = vsel %vm84, %v27, 0.0
  %v99 = vadd.f32 %v97, %v98
  %v100 = vsel %vm84, %v28, 0.0
  %v101 = vadd.f32 %v99, %v100
  %v102 = vsel %vm84, %v29, 0.0
  %v103 = vadd.f32 %v101, %v102
  %v104 = vsel %vm84, %v30, 0.0
  %v105 = vadd.f32 %v103, %v104
  %v106 = vsel %vm84, %v31, 0.0
  %v107 = vadd.f32 %v105, %v106
  %v108 = vsel %vm84, %v32, 0.0
  %v109 = vadd.f32 %v107, %v108
  %v110 = vsel %vm84, %v33, 0.0
  %v111 = vadd.f32 %v109, %v110
  %v112 = vsel %vm84, %v34, 0.0
  %v113 = vadd.f32 %v111, %v112
  %v114 = vsel %vm84, %v35, 0.0
  %v115 = vadd.f32 %v113, %v114
  %v116 = vsel %vm84, %v36, 0.0
  %v117 = vadd.f32 %v115, %v116
  %v118 = vsel %vm84, %v37, 0.0
  %v119 = vadd.f32 %v117, %v118
  %v120 = vsel %vm84, %v38, 0.0
  %v121 = vadd.f32 %v119, %v120
  %v122 = vsel %vm84, %v39, 0.0
  %v123 = vadd.f32 %v121, %v122
  %v124 = vsel %vm84, %v40, 0.0
  %v125 = vadd.f32 %v123, %v124
  %v126 = vsel %vm84, %v41, 0.0
  %v127 = vadd.f32 %v125, %v126
  %v128 = vsel %vm84, %v42, 0.0
  %v129 = vadd.f32 %v127, %v128
  %v130 = vsel %vm84, %v43, 0.0
  %v131 = vadd.f32 %v129, %v130
  %v132 = vsel %vm84, %v44, 0.0
  %v133 = vadd.f32 %v131, %v132
  %v134 = vsel %vm84, %v45, 0.0
  %v135 = vadd.f32 %v133, %v134
  %v136 = vsel %vm84, %v46, 0.0
  %v137 = vadd.f32 %v135, %v136
  %v138 = vsel %vm84, %v47, 0.0
  %v139 = vadd.f32 %v137, %v138
  %v140 = vsel %vm84, %v48, 0.0
  %v141 = vadd.f32 %v139, %v140
  %v142 = vsel %vm84, %v49, 0.0
  %v143 = vadd.f32 %v141, %v142
  %v144 = vsel %vm84, %v50, 0.0
  %v145 = vadd.f32 %v143, %v144
  %v146 = vsel %vm84, %v51, 0.0
  %v147 = vadd.f32 %v145, %v146
  %v148 = vrot.slane %v147, 4
  %v149 = vadd.f32 %v147, %v148
  %v150 = vrot.slane %v149, 2
  %v151 = vadd.f32 %v149, %v150
  %v152 = vrot.slane %v151, 1
  %v153 = vadd.f32 %v151, %v152
  %v154 = vsel %vm84, %v52, 0.0
  %v155 = vsel %vm84, %v53, 0.0
  %v156 = vadd.f32 %v154, %v155
  %v157 = vsel %vm84, %v54, 0.0
  %v158 = vadd.f32 %v156, %v157
  %v159 = vsel %vm84, %v55, 0.0
  %v160 = vadd.f32 %v158, %v159
  %v161 = vsel %vm84, %v56, 0.0
  %v162 = vadd.f32 %v160, %v161
  %v163 = vsel %vm84, %v57, 0.0
  %v164 = vadd.f32 %v162, %v163
  %v165 = vsel %vm84, %v58, 0.0
  %v166 = vadd.f32 %v164, %v165
  %v167 = vsel %vm84, %v59, 0.0
  %v168 = vadd.f32 %v166, %v167
  %v169 = vsel %vm84, %v60, 0.0
  %v170 = vadd.f32 %v168, %v169
  %v171 = vsel %vm84, %v61, 0.0
  %v172 = vadd.f32 %v170, %v171
  %v173 = vsel %vm84, %v62, 0.0
  %v174 = vadd.f32 %v172, %v173
  %v175 = vsel %vm84, %v63, 0.0
  %v176 = vadd.f32 %v174, %v175
  %v177 = vsel %vm84, %v64, 0.0
  %v178 = vadd.f32 %v176, %v177
  %v179 = vsel %vm84, %v65, 0.0
  %v180 = vadd.f32 %v178, %v179
  %v181 = vsel %vm84, %v66, 0.0
  %v182 = vadd.f32 %v180, %v181
  %v183 = vsel %vm84, %v67, 0.0
  %v184 = vadd.f32 %v182, %v183
  %v185 = vsel %vm84, %v68, 0.0
  %v186 = vadd.f32 %v184, %v185
  %v187 = vsel %vm84, %v69, 0.0
  %v188 = vadd.f32 %v186, %v187
  %v189 = vsel %vm84, %v70, 0.0
  %v190 = vadd.f32 %v188, %v189
  %v191 = vsel %vm84, %v71, 0.0
  %v192 = vadd.f32 %v190, %v191
  %v193 = vsel %vm84, %v72, 0.0
  %v194 = vadd.f32 %v192, %v193
  %v195 = vsel %vm84, %v73, 0.0
  %v196 = vadd.f32 %v194, %v195
  %v197 = vsel %vm84, %v74, 0.0
  %v198 = vadd.f32 %v196, %v197
  %v199 = vsel %vm84, %v75, 0.0
  %v200 = vadd.f32 %v198, %v199
  %v201 = vsel %vm84, %v76, 0.0
  %v202 = vadd.f32 %v200, %v201
  %v203 = vsel %vm84, %v77, 0.0
  %v204 = vadd.f32 %v202, %v203
  %v205 = vsel %vm84, %v78, 0.0
  %v206 = vadd.f32 %v204, %v205
  %v207 = vsel %vm84, %v79, 0.0
  %v208 = vadd.f32 %v206, %v207
  %v209 = vsel %vm84, %v80, 0.0
  %v210 = vadd.f32 %v208, %v209
  %v211 = vsel %vm84, %v81, 0.0
  %v212 = vadd.f32 %v210, %v211
  %v213 = vsel %vm84, %v82, 0.0
  %v214 = vadd.f32 %v212, %v213
  %v215 = vsel %vm84, %v83, 0.0
  %v216 = vadd.f32 %v214, %v215
  %v217 = vrot.slane %v216, 4
  %v218 = vadd.f32 %v216, %v217
  %v219 = vrot.slane %v218, 2
  %v220 = vadd.f32 %v218, %v219
  %v221 = vrot.slane %v220, 1
  %v222 = vadd.f32 %v220, %v221
  %v223 = vmul.f32 %v153, 0.00390625
  %v224 = vmul.f32 %v222, 0.00390625
  %v225 = vld [vmem:[%s1] sm:$0xff]
  %v226 = vld [vmem:[%s1 + $0x8] sm:$0xff]
  %v227 = vld [vmem:[%s1 + $0x10] sm:$0xff]
  %v228 = vld [vmem:[%s1 + $0x18] sm:$0xff]
  %v229 = vld [vmem:[%s2] sm:$0x1]
  %v231 = vperm.slane %v229, 0
  %vm235 = vcmask 1041409
  %v236 = vsel %vm235, %v224, %v223
  %v237 = vsel %vm84, %v236, 0
  %239 = vmatpush.msra.mxu0 0.0
  %240 = vmatpush.msra.mxu0 0.0
  %241 = vmatpush.msra.mxu0 0.0
  %242 = vmatpush.msra.mxu0 0.0
  %243 = vmatpush.msra.mxu0 0.0
  %244 = vmatpush.msra.mxu0 0.0
  %245 = vmatpush.msra.mxu0 0.0
  %246 = vmatpush.msra.mxu0 0.0
  %247 = vmatpush.msra.mxu0 0.0
  %248 = vmatpush.msra.mxu0 0.0
  %249 = vmatpush.msra.mxu0 0.0
  %250 = vmatpush.msra.mxu0 0.0
  %251 = vmatpush.msra.mxu0 %v228
  %252 = vmatpush.msra.mxu0 %v227
  %253 = vmatpush.msra.mxu0 %v226
  %254 = vmatpush.msra.mxu0 %v225
  %255 = vmatmul.f32.gmra.mxu0 %v237
  %v256 = vpop.f32.mrf.mxu0
  %v257 = vadd.f32 %v231, %v256
  %258 = vdwg.mxu0
  %v259 = vmax.f32 %v257, 0.0
  %v260 = vld [vmem:[%s3] sm:$0xf]
  %v261 = vld [vmem:[%s4] sm:$0x1]
  %v263 = vperm.slane %v261, 0
  %vm265 = vcmask 31744
  %v267 = vsel %vm265, %v259, 0
  %vm269 = vcmask 1043456
  %v271 = vsel %vm269, %v260, 0
  %273 = vmatpush.msra.mxu0 0.0
  %274 = vmatpush.msra.mxu0 0.0
  %275 = vmatpush.msra.mxu0 0.0
  %276 = vmatpush.msra.mxu0 0.0
  %277 = vmatpush.msra.mxu0 0.0
  %278 = vmatpush.msra.mxu0 0.0
  %279 = vmatpush.msra.mxu0 0.0
  %280 = vmatpush.msra.mxu0 0.0
  %281 = vmatpush.msra.mxu0 0.0
  %282 = vmatpush.msra.mxu0 0.0
  %283 = vmatpush.msra.mxu0 0.0
  %284 = vmatpush.msra.mxu0 0.0
  %285 = vmatpush.msra.mxu0 0.0
  %286 = vmatpush.msra.mxu0 0.0
  %287 = vmatpush.msra.mxu0 0.0
  %288 = vmatpush.msra.mxu0 %v271
  %289 = vmatmul.f32.gmra.mxu0 %v267
  %v290 = vpop.f32.mrf.mxu0
  %v291 = vadd.f32 %v263, %v290
  %292 = vdwg.mxu0
  %v293 = vxor.u32 %v291, 2147483648
  %v294 = vmul.f32 %v293, 1.442695
  %v295 = vpow.pop %v294
  %v296 = vadd.f32 %v295, 1.0
  %v297 = vrcp.pop %v296
  %v298 = vmul.f32 %v296, %v297
  %v299 = vsub.f32 1.0, %v298
  %v300 = vmul.f32 %v297, %v299
  %v301 = vadd.f32 %v297, %v300
  %vm302 = vweird.f32 %v296
  %vm303 = vweird.f32 %v297
  %vm304 = vmor %vm302, %vm303
  %v305 = vsel %vm304, %v297, %v301
  %v306 = vand.u32 2147483647, %v296
  %vm307 = vcmp.eq.f32.partialorder %v306, 8.507059e+37
  %v308 = vand.u32 %v296, 2147483648
  %v309 = vor.u32 1.1754944e-38, %v308
  %v310 = vsel %vm307, %v309, %v305
  %v311 = vmul.f32 1.0, %v310
  %v313 = vrot.slane %v311, 1
  %v314 = vperm.slane %v311, 0
  %v315 = vperm.slane %v313, 0
  %v318 = vmul.f32 %v20, %v314
  %v319 = vmul.f32 %v21, %v314
  %v320 = vmul.f32 %v22, %v314
  %v321 = vmul.f32 %v23, %v314
  %v322 = vmul.f32 %v24, %v314
  %v323 = vmul.f32 %v25, %v314
  %v324 = vmul.f32 %v26, %v314
  %v325 = vmul.f32 %v27, %v314
  %v326 = vmul.f32 %v28, %v314
  %v327 = vmul.f32 %v29, %v314
  %v328 = vmul.f32 %v30, %v314
  %v329 = vmul.f32 %v31, %v314
  %v330 = vmul.f32 %v32, %v314
  %v331 = vmul.f32 %v33, %v314
  %v332 = vmul.f32 %v34, %v314
  %v333 = vmul.f32 %v35, %v314
  %v334 = vmul.f32 %v36, %v314
  %v335 = vmul.f32 %v37, %v314
  %v336 = vmul.f32 %v38, %v314
  %v337 = vmul.f32 %v39, %v314
  %v338 = vmul.f32 %v40, %v314
  %v339 = vmul.f32 %v41, %v314
  %v340 = vmul.f32 %v42, %v314
  %v341 = vmul.f32 %v43, %v314
  %v342 = vmul.f32 %v44, %v314
  %v343 = vmul.f32 %v45, %v314
  %v344 = vmul.f32 %v46, %v314
  %v345 = vmul.f32 %v47, %v314
  %v346 = vmul.f32 %v48, %v314
  %v347 = vmul.f32 %v49, %v314
  %v348 = vmul.f32 %v50, %v314
  %v349 = vmul.f32 %v51, %v314
  %v350 = vmul.f32 %v52, %v315
  %v351 = vmul.f32 %v53, %v315
  %v352 = vmul.f32 %v54, %v315
  %v353 = vmul.f32 %v55, %v315
  %v354 = vmul.f32 %v56, %v315
  %v355 = vmul.f32 %v57, %v315
  %v356 = vmul.f32 %v58, %v315
  %v357 = vmul.f32 %v59, %v315
  %v358 = vmul.f32 %v60, %v315
  %v359 = vmul.f32 %v61, %v315
  %v360 = vmul.f32 %v62, %v315
  %v361 = vmul.f32 %v63, %v315
  %v362 = vmul.f32 %v64, %v315
  %v363 = vmul.f32 %v65, %v315
  %v364 = vmul.f32 %v66, %v315
  %v365 = vmul.f32 %v67, %v315
  %v366 = vmul.f32 %v68, %v315
  %v367 = vmul.f32 %v69, %v315
  %v368 = vmul.f32 %v70, %v315
  %v369 = vmul.f32 %v71, %v315
  %v370 = vmul.f32 %v72, %v315
  %v371 = vmul.f32 %v73, %v315
  %v372 = vmul.f32 %v74, %v315
  %v373 = vmul.f32 %v75, %v315
  %v374 = vmul.f32 %v76, %v315
  %v375 = vmul.f32 %v77, %v315
  %v376 = vmul.f32 %v78, %v315
  %v377 = vmul.f32 %v79, %v315
  %v378 = vmul.f32 %v80, %v315
  %v379 = vmul.f32 %v81, %v315
  %v380 = vmul.f32 %v82, %v315
  %v381 = vmul.f32 %v83, %v315
  %382 = vst.msk [vmem:[%s5] sm:$0xff] %vm84, %v318
  %383 = vst.msk [vmem:[%s5 + $0x8] sm:$0xff] %vm84, %v319
  %384 = vst.msk [vmem:[%s5 + $0x10] sm:$0xff] %vm84, %v320
  %385 = vst.msk [vmem:[%s5 + $0x18] sm:$0xff] %vm84, %v321
  %386 = vst.msk [vmem:[%s5 + $0x20] sm:$0xff] %vm84, %v322
  %387 = vst.msk [vmem:[%s5 + $0x28] sm:$0xff] %vm84, %v323
  %388 = vst.msk [vmem:[%s5 + $0x30] sm:$0xff] %vm84, %v324
  %389 = vst.msk [vmem:[%s5 + $0x38] sm:$0xff] %vm84, %v325
  %390 = vst.msk [vmem:[%s5 + $0x40] sm:$0xff] %vm84, %v326
  %391 = vst.msk [vmem:[%s5 + $0x48] sm:$0xff] %vm84, %v327
  %392 = vst.msk [vmem:[%s5 + $0x50] sm:$0xff] %vm84, %v328
  %393 = vst.msk [vmem:[%s5 + $0x58] sm:$0xff] %vm84, %v329
  %394 = vst.msk [vmem:[%s5 + $0x60] sm:$0xff] %vm84, %v330
  %395 = vst.msk [vmem:[%s5 + $0x68] sm:$0xff] %vm84, %v331
  %396 = vst.msk [vmem:[%s5 + $0x70] sm:$0xff] %vm84, %v332
  %397 = vst.msk [vmem:[%s5 + $0x78] sm:$0xff] %vm84, %v333
  %398 = vst.msk [vmem:[%s5 + $0x80] sm:$0xff] %vm84, %v334
  %399 = vst.msk [vmem:[%s5 + $0x88] sm:$0xff] %vm84, %v335
  %400 = vst.msk [vmem:[%s5 + $0x90] sm:$0xff] %vm84, %v336
  %401 = vst.msk [vmem:[%s5 + $0x98] sm:$0xff] %vm84, %v337
  %402 = vst.msk [vmem:[%s5 + $0xa0] sm:$0xff] %vm84, %v338
  %403 = vst.msk [vmem:[%s5 + $0xa8] sm:$0xff] %vm84, %v339
  %404 = vst.msk [vmem:[%s5 + $0xb0] sm:$0xff] %vm84, %v340
  %405 = vst.msk [vmem:[%s5 + $0xb8] sm:$0xff] %vm84, %v341
  %406 = vst.msk [vmem:[%s5 + $0xc0] sm:$0xff] %vm84, %v342
  %407 = vst.msk [vmem:[%s5 + $0xc8] sm:$0xff] %vm84, %v343
  %408 = vst.msk [vmem:[%s5 + $0xd0] sm:$0xff] %vm84, %v344
  %409 = vst.msk [vmem:[%s5 + $0xd8] sm:$0xff] %vm84, %v345
  %410 = vst.msk [vmem:[%s5 + $0xe0] sm:$0xff] %vm84, %v346
  %411 = vst.msk [vmem:[%s5 + $0xe8] sm:$0xff] %vm84, %v347
  %412 = vst.msk [vmem:[%s5 + $0xf0] sm:$0xff] %vm84, %v348
  %413 = vst.msk [vmem:[%s5 + $0xf8] sm:$0xff] %vm84, %v349
  %414 = vst.msk [vmem:[%s5 + $0x100] sm:$0xff] %vm84, %v350
  %415 = vst.msk [vmem:[%s5 + $0x108] sm:$0xff] %vm84, %v351
  %416 = vst.msk [vmem:[%s5 + $0x110] sm:$0xff] %vm84, %v352
  %417 = vst.msk [vmem:[%s5 + $0x118] sm:$0xff] %vm84, %v353
  %418 = vst.msk [vmem:[%s5 + $0x120] sm:$0xff] %vm84, %v354
  %419 = vst.msk [vmem:[%s5 + $0x128] sm:$0xff] %vm84, %v355
  %420 = vst.msk [vmem:[%s5 + $0x130] sm:$0xff] %vm84, %v356
  %421 = vst.msk [vmem:[%s5 + $0x138] sm:$0xff] %vm84, %v357
  %422 = vst.msk [vmem:[%s5 + $0x140] sm:$0xff] %vm84, %v358
  %423 = vst.msk [vmem:[%s5 + $0x148] sm:$0xff] %vm84, %v359
  %424 = vst.msk [vmem:[%s5 + $0x150] sm:$0xff] %vm84, %v360
  %425 = vst.msk [vmem:[%s5 + $0x158] sm:$0xff] %vm84, %v361
  %426 = vst.msk [vmem:[%s5 + $0x160] sm:$0xff] %vm84, %v362
  %427 = vst.msk [vmem:[%s5 + $0x168] sm:$0xff] %vm84, %v363
  %428 = vst.msk [vmem:[%s5 + $0x170] sm:$0xff] %vm84, %v364
  %429 = vst.msk [vmem:[%s5 + $0x178] sm:$0xff] %vm84, %v365
  %430 = vst.msk [vmem:[%s5 + $0x180] sm:$0xff] %vm84, %v366
  %431 = vst.msk [vmem:[%s5 + $0x188] sm:$0xff] %vm84, %v367
  %432 = vst.msk [vmem:[%s5 + $0x190] sm:$0xff] %vm84, %v368
  %433 = vst.msk [vmem:[%s5 + $0x198] sm:$0xff] %vm84, %v369
  %434 = vst.msk [vmem:[%s5 + $0x1a0] sm:$0xff] %vm84, %v370
  %435 = vst.msk [vmem:[%s5 + $0x1a8] sm:$0xff] %vm84, %v371
  %436 = vst.msk [vmem:[%s5 + $0x1b0] sm:$0xff] %vm84, %v372
  %437 = vst.msk [vmem:[%s5 + $0x1b8] sm:$0xff] %vm84, %v373
  %438 = vst.msk [vmem:[%s5 + $0x1c0] sm:$0xff] %vm84, %v374
  %439 = vst.msk [vmem:[%s5 + $0x1c8] sm:$0xff] %vm84, %v375
  %440 = vst.msk [vmem:[%s5 + $0x1d0] sm:$0xff] %vm84, %v376
  %441 = vst.msk [vmem:[%s5 + $0x1d8] sm:$0xff] %vm84, %v377
  %442 = vst.msk [vmem:[%s5 + $0x1e0] sm:$0xff] %vm84, %v378
  %443 = vst.msk [vmem:[%s5 + $0x1e8] sm:$0xff] %vm84, %v379
  %444 = vst.msk [vmem:[%s5 + $0x1f0] sm:$0xff] %vm84, %v380
  %445 = vst.msk [vmem:[%s5 + $0x1f8] sm:$0xff] %vm84, %v381
  // Predicated region
  $region22: #{tpu_custom_call.1} parent=0 // pred_check
    _
  $region23: #{tpu_custom_call.1} parent=0 // pred_check_branch
    %447 = sbr.rel (0) target = $region25
  $region24: #{tpu_custom_call.1} parent=0 // pred_region
    _
  $region25: #{tpu_custom_call.1} parent=0 // pred_fallthru
    _
  // Predicated region
  $region26: #{tpu_custom_call.1} parent=0 // pred_check
    _
  $region27: #{tpu_custom_call.1} parent=0 // pred_check_branch
    %449 = sbr.rel (0) target = $region29
  $region28: #{tpu_custom_call.1} parent=0 // pred_region
    _
  $region29: #{tpu_custom_call.1} parent=0 // pred_fallthru
    _

</llo_original>
